<compile_context>
chip_gen: v6e
topology: v6e:2x2x1
jax: 0.10.0
libtpu: 0.0.40
codegen_flags: <defaults>
</compile_context>

<pallas_src>
import functools

import jax
import jax.numpy as jnp
from jax.experimental import pallas as pl
from jax.experimental.pallas import tpu as pltpu

_LANE = 128
_MIB = 1024 * 1024
# Ragged tensors at or below this many elements run as a single full-extent
# block (worst-case VMEM footprint stays small even with sublane padding).
_RAGGED_SINGLE_BLOCK_ELEMS = 64 * 1024


def _sublane_multiple(dtype) -> int:
    # Sub-32-bit dtypes pack along sublanes: bf16 -> 16 rows/vreg, int8/fp8 -> 32.
    itemsize = jnp.dtype(dtype).itemsize
    return {4: 8, 2: 16, 1: 32}.get(itemsize, 8)


@functools.lru_cache(maxsize=None)
def _vmem_budget():
    """Returns (per-buffer block byte target, vmem_limit_bytes), per generation."""
    try:
        cap = pltpu.get_tpu_info().vmem_capacity_bytes
    except Exception:
        cap = 64 * _MIB  # conservative (v7x-sized) fallback
    # ~1/12 of VMEM per buffer: with Buffered(3) on input + output that is
    # ~half of VMEM in buffers, leaving headroom for compiler scratch.
    #   v5e/v6e (128 MiB): 8 MiB blocks, 64 MiB limit
    #   v7x     ( 64 MiB): ~5.3 MiB blocks, 48 MiB limit
    target = max(2 * _MIB, min(8 * _MIB, cap // 12))
    limit = min(3 * cap // 4, 6 * target + 16 * _MIB)
    return target, limit


def _sigmoid_kernel(x_ref, o_ref):
    x = x_ref[...].astype(jnp.float32)
    # exp() runs on the EUP slot; the exact f32 divide keeps bit-level parity
    # with jax.nn.sigmoid.  The kernel is HBM-bound, so the VALU cost of the
    # divide is fully hidden behind the DMA window.
    o_ref[...] = (1.0 / (1.0 + jnp.exp(-x))).astype(o_ref.dtype)


def _sigmoid_2d(x2d: jax.Array, *, tr: int, grid_steps: int, vmem_limit: int) -> jax.Array:
    rows, lanes = x2d.shape
    itemsize = jnp.dtype(x2d.dtype).itemsize

    spec_kwargs = {}
    if grid_steps >= 3:
        # Pure streaming kernel: a third buffer hides DMA issue/completion
        # jitter across grid steps.  VMEM = 6 blocks, covered by vmem_limit.
        spec_kwargs["pipeline_mode"] = pl.Buffered(3)

    return pl.pallas_call(
        _sigmoid_kernel,
        out_shape=jax.ShapeDtypeStruct((rows, lanes), x2d.dtype),
        grid_spec=pltpu.PrefetchScalarGridSpec(
            num_scalar_prefetch=0,
            grid=(grid_steps,),
            in_specs=[pl.BlockSpec((tr, lanes), lambda i: (i, 0), **spec_kwargs)],
            out_specs=pl.BlockSpec((tr, lanes), lambda i: (i, 0), **spec_kwargs),
        ),
        compiler_params=pltpu.CompilerParams(
            dimension_semantics=("parallel",),
            vmem_limit_bytes=vmem_limit,
        ),
        cost_estimate=pl.CostEstimate(
            flops=3 * rows * lanes,
            transcendentals=rows * lanes,
            bytes_accessed=2 * rows * lanes * itemsize,
        ),
    )(x2d)


def sigmoid_pallas(x: jax.Array, *, min_pallas_numel: int = 0) -> jax.Array:
    """Elementwise sigmoid via a Pallas TPU kernel.

    Set min_pallas_numel to e.g. 1 << 16 in production to dispatch tiny
    tensors to XLA's fused elementwise instead of launching a kernel.
    """
    orig_shape = x.shape
    orig_dtype = x.dtype
    n = x.size

    if n == 0:
        return x
    if n < min_pallas_numel:
        return jax.nn.sigmoid(x.astype(jnp.float32)).astype(orig_dtype)

    itemsize = jnp.dtype(orig_dtype).itemsize
    sub = _sublane_multiple(orig_dtype)
    target_bytes, vmem_limit = _vmem_budget()

    # ---- choose a lane-dense 2-D slab (rows, lanes); no padding when possible
    lanes = None
    for cand in (1024, 512, 256, _LANE):
        if n % cand == 0:
            lanes = cand
            break

    if lanes is None:
        # Ragged numel (rare).  Avoid jnp.pad + trailing slice: each would add
        # a full extra HBM pass on an otherwise roofline-bound kernel.
        flat = x.reshape(-1)
        if n <= _RAGGED_SINGLE_BLOCK_ELEMS:
            # One full-extent (1, n) block (full-array blocks are exempt from
            # the (8, 128) divisibility rule).  Zero extra copies.
            out = pl.pallas_call(
                _sigmoid_kernel,
                out_shape=jax.ShapeDtypeStruct((1, n), orig_dtype),
                cost_estimate=pl.CostEstimate(
                    flops=3 * n, transcendentals=n, bytes_accessed=2 * n * itemsize
                ),
            )(flat.reshape(1, n))
            return out.reshape(orig_shape)
        # Large ragged: kernel on the 128-divisible prefix, XLA sigmoid on the
        # (<128-element) tail; one concatenate instead of pad + kernel + slice.
        head = (n // _LANE) * _LANE
        y_head = sigmoid_pallas(flat[:head])
        y_tail = jax.nn.sigmoid(flat[head:].astype(jnp.float32)).astype(orig_dtype)
        return jnp.concatenate([y_head, y_tail]).reshape(orig_shape)

    rows = n // lanes
    x2d = x.reshape(rows, lanes)

    # ---- block rows: generation-aware byte target, rounded to sublane packing
    bytes_per_row = lanes * itemsize
    target_rows = max(sub, (target_bytes // bytes_per_row) // sub * sub)

    if rows <= target_rows:
        if rows >= 2 * sub:
            # Split mid-size tensors into (at least) 2 blocks so the 1-D
            # "parallel" grid axis gives v7x's second TensorCore work.
            half = pl.cdiv(rows, 2)
            tr = ((half + sub - 1) // sub) * sub
            grid_steps = pl.cdiv(rows, tr)
        else:
            # Tiny tensor: single block equal to the full array dims (exempt
            # from the (8, 128) divisibility rule).
            tr = rows
            grid_steps = 1
    else:
        # Partial last block (if rows % tr != 0) is handled by Pallas: OOB
        # writes are masked and sigmoid of garbage rows is discarded.
        tr = target_rows
        grid_steps = pl.cdiv(rows, tr)

    out2d = _sigmoid_2d(x2d, tr=tr, grid_steps=grid_steps, vmem_limit=vmem_limit)
    return out2d.reshape(orig_shape)


class Model:
    """JAX/Pallas equivalent of the PyTorch Model: forward(x) = sigmoid(x)."""

    def __init__(self):
        pass  # ReLU is declared in the PyTorch module but never used in forward.

    def __call__(self, x):
        return sigmoid_pallas(x)


if __name__ == "__main__":
    key = jax.random.PRNGKey(0)
    model = Model()

    # Spec shape from the PyTorch module: NCHW, batch=2, channels=4, 16x16.
    x = jax.random.normal(key, (2, 4, 16, 16), dtype=jnp.float32)
    y = jax.block_until_ready(model(x))
    y_ref = jax.nn.sigmoid(x)
    assert y.shape == x.shape and y.dtype == x.dtype
    assert float(jnp.max(jnp.abs(y - y_ref))) < 1e-6

    # Mid-size tensor: exercises the 2-way split (megacore) path.
    k1, k2, k3 = jax.random.split(key, 3)
    x_mid = jax.random.normal(k1, (16, 16, 64, 64), dtype=jnp.float32)   # 4 MiB
    y_mid = jax.block_until_ready(sigmoid_pallas(x_mid))
    assert float(jnp.max(jnp.abs(y_mid - jax.nn.sigmoid(x_mid)))) < 1e-6

    # Larger tensor: exercises the multi-step grid + Buffered(3) path.
    x_big = jax.random.normal(k2, (6, 4, 512, 512), dtype=jnp.float32)   # 24 MiB
    y_big = jax.block_until_ready(sigmoid_pallas(x_big))
    assert float(jnp.max(jnp.abs(y_big - jax.nn.sigmoid(x_big)))) < 1e-6

    # Ragged numel: exercises the copy-free single-block (1, n) path.
    x_rag = jax.random.normal(k3, (2, 3, 5, 7), dtype=jnp.float32)       # 210 elems
    y_rag = jax.block_until_ready(sigmoid_pallas(x_rag))
    assert y_rag.shape == x_rag.shape
    assert float(jnp.max(jnp.abs(y_rag - jax.nn.sigmoid(x_rag)))) < 1e-6

    print("KERNEL_OK")
</pallas_src>

<mosaic_0001>
module attributes {stable_mosaic.version = 11 : i64} {
  func.func @_sigmoid_kernel(%arg0: i32, %arg1: memref<2x1024xf32, #tpu.memory_space<vmem>>, %arg2: memref<2x1024xf32, #tpu.memory_space<vmem>>) attributes {dimension_semantics = [#tpu.dimension_semantics<parallel>], iteration_bounds = array<i64: 1>, scalar_prefetch = 0 : i64, scratch_operands = 0 : i64, tpu.core_type = #tpu.core_type<tc>, window_params = [{transform_indices = @transform_0, window_bounds = array<i64: 2, 1024>}, {transform_indices = @transform_1, window_bounds = array<i64: 2, 1024>}]} {
    %c0 = arith.constant 0 : index
    %c0_0 = arith.constant 0 : index
    %0 = vector.load %arg1[%c0, %c0_0] : memref<2x1024xf32, #tpu.memory_space<vmem>>, vector<2x1024xf32>
    %cst = arith.constant 0.000000e+00 : f32
    %1 = vector.broadcast %cst : f32 to vector<2x1024xf32>
    %2 = arith.subf %1, %0 : vector<2x1024xf32>
    %3 = math.exp %2 : vector<2x1024xf32>
    %cst_1 = arith.constant 1.000000e+00 : f32
    %4 = vector.broadcast %cst_1 : f32 to vector<2x1024xf32>
    %5 = arith.addf %4, %3 : vector<2x1024xf32>
    %cst_2 = arith.constant 1.000000e+00 : f32
    %6 = vector.broadcast %cst_2 : f32 to vector<2x1024xf32>
    %7 = arith.divf %6, %5 : vector<2x1024xf32>
    %c0_3 = arith.constant 0 : index
    %c0_4 = arith.constant 0 : index
    %8 = vector.load %arg2[%c0_3, %c0_4] : memref<2x1024xf32, #tpu.memory_space<vmem>>, vector<2x1024xf32>
    tpu.vector_store %arg2[%c0_3, %c0_4], %7 {strides = array<i32>} : memref<2x1024xf32, #tpu.memory_space<vmem>>, vector<2x1024xf32>,
    return
  }
  func.func @transform_0(%arg0: i32) -> (i32, i32) {
    %c0_i32 = arith.constant 0 : i32
    %c0_i32_0 = arith.constant 0 : i32
    return %arg0, %c0_i32 : i32, i32
  }
  func.func @transform_1(%arg0: i32) -> (i32, i32) {
    %c0_i32 = arith.constant 0 : i32
    %c0_i32_0 = arith.constant 0 : i32
    return %arg0, %c0_i32 : i32, i32
  }
}

</mosaic_0001>

<llo_original>
// kernel: tpu_custom_call.1
$region0: #{tpu_custom_call.1}
  #allocation0 [shape = 'u32[]', space=smem, size = 0x4, offset = 0x4, fixed_abs, tag = 'smem constant byte address 0x4 - core index']
  #allocation1 [shape = 'u32[144,128]{1,0:T(1,128)}', space=vmem, size = 0x12000, scoped, tag = 'internal scratch']
  %s0 = inlined_call_operand.hbm [shape: f32[2,1024], index: 0, kind: input, shape index: {}]
  %s1 = inlined_call_operand.hbm [shape: f32[2,1024], index: 1, kind: output, shape index: {}]
  %s2 = sld [smem:[#allocation0]]
  $region18: #{tpu_custom_call.1} parent=0
    _
  %s4 = ssub.s32 1, %s2
  %s5 = scalar_select 0, %s4, %s2
  $region1: #{tpu_custom_call.1} parent=0
    #allocation2 [shape = 'u8[8192]{0}', space=vmem, size = 0x2000, scoped, tag = 'input window, operand 0, single buffered']
    #allocation3 [shape = 's32[1]{0}', space=sflag, size = 0x4, scoped, tag = 'scoped memory for tpu_custom_call.1']
    #allocation4 [shape = 's32[1]{0}', space=sflag, size = 0x4, scoped, tag = 'scoped memory for tpu_custom_call.1']
    #allocation5 [shape = 'u8[8192]{0}', space=vmem, size = 0x2000, scoped, tag = 'output window, operand 0, single buffered']
    %6 = vsyncpa [#allocation3], 0
    %7 = vsyncpa [#allocation4], 0
    // Predicated region
    $region2: #{tpu_custom_call.1} parent=1 // pred_check
      _
    $region3: #{tpu_custom_call.1} parent=1 // pred_check_branch
      %9 = sbr.rel (0) target = $region5
    $region4: #{tpu_custom_call.1} parent=1 // pred_region
      %s11 = ssub.s32 256, 256
      %12 = vsyncadd [#allocation3], %s11
      %s14 = sshll.u32 [#allocation2], 4
      %s15 = int_to_ptr.vmem [resolvable:$true] %s14
      %17 = dma.hbm_to_vmem [thread:$0]  %s0, 256, %s15, [#allocation3]
    $region5: #{tpu_custom_call.1} parent=1 // pred_fallthru
      _
    // Predicated region
    $region6: #{tpu_custom_call.1} parent=1 // pred_check
      _
    $region7: #{tpu_custom_call.1} parent=1 // pred_check_branch
      %19 = sbr.rel (0) target = $region9
    $region8: #{tpu_custom_call.1} parent=1 // pred_region
      %20 = dma.done [#allocation3], 256
    $region9: #{tpu_custom_call.1} parent=1 // pred_fallthru
      _
    %v21 = vld [vmem:[#allocation2] sm:$0xff]
    %v22 = vld [vmem:[#allocation2 + $0x8] sm:$0xff]
    %v23 = vsub.f32 0.0, %v21
    %v24 = vsub.f32 0.0, %v22
    %v25 = vmul.f32 %v23, 1.442695
    %v26 = vpow.pop %v25
    %v27 = vmul.f32 %v24, 1.442695
    %v28 = vpow.pop %v27
    %v29 = vadd.f32 %v26, 1.0
    %v30 = vadd.f32 %v28, 1.0
    %v31 = vrcp.pop %v29
    %v32 = vmul.f32 1.0, %v31
    %v33 = vrcp.pop %v30
    %v34 = vmul.f32 1.0, %v33
    %35 = vst [vmem:[#allocation5] sm:$0xff] %v32
    %36 = vst [vmem:[#allocation5 + $0x8] sm:$0xff] %v34
    // Predicated region
    $region10: #{tpu_custom_call.1} parent=1 // pred_check
      _
    $region11: #{tpu_custom_call.1} parent=1 // pred_check_branch
      %38 = sbr.rel (0) target = $region13
    $region12: #{tpu_custom_call.1} parent=1 // pred_region
      %s40 = ssub.s32 256, 256
      %41 = vsyncadd [#allocation4], %s40
      %s43 = sshll.u32 [#allocation5], 4
      %s44 = int_to_ptr.vmem [resolvable:$true] %s43
      %46 = dma.vmem_to_hbm [thread:$0]  %s44, 256, %s1, [#allocation4]
    $region13: #{tpu_custom_call.1} parent=1 // pred_fallthru
      _
    // Predicated region
    $region14: #{tpu_custom_call.1} parent=1 // pred_check
      _
    $region15: #{tpu_custom_call.1} parent=1 // pred_check_branch
      %48 = sbr.rel (0) target = $region17
    $region16: #{tpu_custom_call.1} parent=1 // pred_region
      %49 = dma.done [#allocation4], 256
    $region17: #{tpu_custom_call.1} parent=1 // pred_fallthru
      _
    %50 = vsyncpa [#allocation3], 1
    %51 = vsyncpa [#allocation4], 1

</llo_original>
